<compile_context>
chip_gen: v7x
topology: tpu7x:2x2x1
jax: 0.10.0
libtpu: 0.0.40
codegen_flags: <defaults>
</compile_context>

<pallas_src>
import functools

import jax
import jax.numpy as jnp
from jax.experimental import pallas as pl
from jax.experimental.pallas import tpu as pltpu

LANES = 128
SUBLANES = 8                      # f32 native sublane tile
TILE_BYTES = 4 * 1024 * 1024      # ~4 MiB per input per pipeline buffer
SMALL_INPUT_BYTES = 256 * 1024    # below this, plain JAX beats a kernel launch


def _round_up(x, m):
    return ((x + m - 1) // m) * m


def _sublane_multiple(dtype):
    # Native sublane tile: 8 rows for 4-byte dtypes, 16 for 2-byte, 32 for 1-byte.
    itemsize = jnp.dtype(dtype).itemsize
    return SUBLANES * max(1, 4 // itemsize)


def _num_tensorcores():
    """2 for chips exposing two TensorCores per device (v7x), else 1."""
    try:
        kind = jax.devices()[0].device_kind.lower()
    except Exception:
        return 1
    # v5e / v6e expose a single TensorCore per device; only v7x-class devices
    # benefit from a core-parallel shard axis here.
    if "7" in kind:
        return 2
    return 1


def _mse_kernel(x_ref, t_ref, o_ref, *, rows, tile, steps_per_shard, needs_mask):
    """Accumulates per-(sublane, lane) partial sums of (x - t)^2.

    x_ref / t_ref : (tile, LANES) tiles of input / target (native dtype).
    o_ref         : (1, SUBLANES, LANES) f32 partial-sum block, resident across
                    the reduction axis (same block index for every step i).
    """
    s = pl.program_id(0)   # shard axis (core-parallel on 2-TC chips)
    i = pl.program_id(1)   # reduction steps (arbitrary / sequential)

    @pl.when(i == 0)
    def _init():
        o_ref[...] = jnp.zeros_like(o_ref)

    block_start = (s * steps_per_shard + i) * tile   # logical (unclamped) start row

    def accumulate(masked):
        diff = x_ref[...].astype(jnp.float32) - t_ref[...].astype(jnp.float32)
        if masked:
            # Mask rows beyond the true extent; garbage (even NaN/Inf) in the
            # padded region is selected away before squaring.
            row_ids = block_start + jax.lax.broadcasted_iota(
                jnp.int32, (tile, LANES), 0)
            diff = jnp.where(row_ids < rows, diff, 0.0)
        sq = diff * diff
        # Pure-VPU fold of the tile's sublane groups onto one (8, 128) vreg.
        partial = jnp.sum(sq.reshape(tile // SUBLANES, SUBLANES, LANES), axis=0)
        o_ref[...] += partial[None, :, :]

    if needs_mask:
        ragged = block_start + tile > rows   # only over-running blocks pay for the mask

        @pl.when(ragged)
        def _masked():
            accumulate(True)

        @pl.when(jnp.logical_not(ragged))
        def _unmasked():
            accumulate(False)
    else:
        accumulate(False)


def _split_slab(x):
    """Flatten to a lane-dense (rows, 128) slab plus an optional (<128,) tail.

    Copy-free (bitcast reshape) when numel is a multiple of 128.
    """
    flat = x.reshape(-1)
    n = flat.shape[0]
    rows = n // LANES
    split = rows * LANES
    if split == n:
        return flat.reshape(rows, LANES), None
    # TODO(synk): for misaligned shapes the prefix slice is still an HBM copy;
    # a manual-DMA (memory_space=pl.ANY) path would avoid it entirely.
    main = jax.lax.slice(flat, (0,), (split,)).reshape(rows, LANES)
    tail = jax.lax.slice(flat, (split,), (n,))
    return main, tail


def _sse_partials(x_slab, t_slab):
    """Pallas call returning (num_shards, 8, 128) f32 partial sums of squares."""
    rows = x_slab.shape[0]
    sub = max(_sublane_multiple(x_slab.dtype), _sublane_multiple(t_slab.dtype))
    isz_x = jnp.dtype(x_slab.dtype).itemsize
    isz_t = jnp.dtype(t_slab.dtype).itemsize

    # Dtype-aware tile: ~TILE_BYTES per input per pipeline buffer, rounded to
    # the dtype-native sublane tile and never larger than the slab.
    budget_rows = max(sub, (TILE_BYTES // (LANES * max(isz_x, isz_t))) // sub * sub)
    tile = min((rows // sub) * sub, budget_rows)

    total_blocks = pl.cdiv(rows, tile)
    num_shards = _num_tensorcores() if total_blocks >= 2 else 1
    steps = pl.cdiv(total_blocks, num_shards)
    needs_mask = (num_shards * steps * tile) != rows
    last_block = total_blocks - 1

    def in_map(s, i):
        # Clamp so the auto-DMA never walks past the slab even for the (at most
        # one) fully-out-of-range virtual block of an odd shard split; the
        # kernel mask zeroes its contribution using the unclamped index.
        return (jnp.minimum(s * steps + i, last_block), 0)

    kernel = functools.partial(
        _mse_kernel, rows=rows, tile=tile, steps_per_shard=steps,
        needs_mask=needs_mask)

    in_spec = pl.BlockSpec((tile, LANES), in_map)
    out_spec = pl.BlockSpec((1, SUBLANES, LANES), lambda s, i: (s, 0, 0))

    # 2 pipeline buffers per input + the resident output block(s) + headroom.
    in_bytes = 2 * tile * LANES * (isz_x + isz_t)
    out_bytes = 2 * num_shards * SUBLANES * LANES * 4
    vmem_limit = int(min(max(in_bytes + out_bytes + (4 << 20), 16 << 20), 48 << 20))

    def call(shard_semantics):
        return pl.pallas_call(
            kernel,
            out_shape=jax.ShapeDtypeStruct(
                (num_shards, SUBLANES, LANES), jnp.float32),
            grid=(num_shards, steps),
            in_specs=[in_spec, in_spec],
            out_specs=out_spec,
            compiler_params=pltpu.CompilerParams(
                dimension_semantics=(shard_semantics, pltpu.ARBITRARY),
                vmem_limit_bytes=vmem_limit),
        )(x_slab, t_slab)

    if num_shards > 1:
        # CORE_PARALLEL puts the two shards on the two TensorCores (v7x).
        try:
            return call(pltpu.CORE_PARALLEL)
        except Exception:
            return call(pltpu.PARALLEL)
    return call(pltpu.ARBITRARY)


def mse_loss_pallas(x, target, *, target_slabs=None,
                    small_input_bytes=SMALL_INPUT_BYTES):
    """mean((x - target)^2), streamed through the Pallas kernel for large inputs."""
    assert x.shape == target.shape, "input/target shape mismatch"
    n = int(x.size)
    if n == 0:
        return jnp.float32(0.0)

    sub = max(_sublane_multiple(x.dtype), _sublane_multiple(target.dtype))
    nbytes = n * jnp.dtype(x.dtype).itemsize
    if nbytes < small_input_bytes or n < sub * LANES:
        # Small-input fast path: kernel-launch overhead would dominate.
        d = x.astype(jnp.float32) - target.astype(jnp.float32)
        return jnp.mean(d * d)

    x_main, x_tail = _split_slab(x)
    if target_slabs is None:
        t_main, t_tail = _split_slab(target)
    else:
        t_main, t_tail = target_slabs

    sse = jnp.sum(_sse_partials(x_main, t_main))
    if x_tail is not None:
        dt = x_tail.astype(jnp.float32) - t_tail.astype(jnp.float32)
        sse = sse + jnp.sum(dt * dt)
    return sse / jnp.float32(n)


class ContentLoss:
    """JAX/Pallas port of the PyTorch ContentLoss module (forward pass)."""

    def __init__(self, target, *, small_input_bytes=SMALL_INPUT_BYTES):
        # target.detach() in torch -> stop_gradient (constant).
        self.target = jax.lax.stop_gradient(jnp.asarray(target))
        self._small_input_bytes = small_input_bytes
        nbytes = int(self.target.size) * jnp.dtype(self.target.dtype).itemsize
        # Pre-split the fixed target once so the per-call work touches only x.
        self._target_slabs = (
            _split_slab(self.target) if nbytes >= small_input_bytes else None)
        self.loss = None

    def compute_loss(self, x):
        return mse_loss_pallas(
            x, self.target, target_slabs=self._target_slabs,
            small_input_bytes=self._small_input_bytes)

    def __call__(self, x):
        # TODO(synk): self.loss is a Python-attribute side effect (mirrors the
        # torch module); it will not survive jax.jit tracing of __call__ — use
        # compute_loss() for a functional API.
        self.loss = self.compute_loss(x)
        # Like the PyTorch module: return the input unchanged (pass-through).
        return x


if __name__ == "__main__":
    key = jax.random.PRNGKey(0)
    k1, k2, k3, k4 = jax.random.split(key, 4)

    def check(shape, ka, kb, force_kernel=True):
        target = jax.random.normal(ka, shape, dtype=jnp.float32)
        x = jax.random.normal(kb, shape, dtype=jnp.float32)
        small = 0 if force_kernel else SMALL_INPUT_BYTES
        cl = ContentLoss(target, small_input_bytes=small)
        out = cl(x)
        out = jax.block_until_ready(out)
        loss = jax.block_until_ready(cl.loss)
        ref = jnp.mean((x.astype(jnp.float32) - target.astype(jnp.float32)) ** 2)
        assert jnp.allclose(loss, ref, rtol=1e-5, atol=1e-6), (shape, loss, ref)
        assert out.shape == x.shape and jnp.array_equal(out, x)

    # Small NCHW feature maps (aligned numel -> single-block kernel path).
    check((2, 4, 16, 16), k1, k2)
    # Multi-step grid with a ragged (masked) last block: 21 rows of 128 lanes.
    check((2, 4, 21, 16), k1, k3)
    # Misaligned numel: aligned prefix through the kernel + tiny plain-JAX tail.
    check((2, 4, 15, 17), k2, k4)
    # Default small-input fast path (no pallas_call).
    check((2, 4, 16, 16), k3, k4, force_kernel=False)

    print("KERNEL_OK")
</pallas_src>

<mosaic_0001>
module attributes {stable_mosaic.version = 11 : i64} {
  func.func @_mse_kernel(%arg0: i32, %arg1: i32, %arg2: memref<16x128xf32, #tpu.memory_space<vmem>>, %arg3: memref<16x128xf32, #tpu.memory_space<vmem>>, %arg4: memref<1x8x128xf32, #tpu.memory_space<vmem>>) attributes {dimension_semantics = [#tpu.dimension_semantics<arbitrary>, #tpu.dimension_semantics<arbitrary>], iteration_bounds = array<i64: 1, 1>, scalar_prefetch = 0 : i64, scratch_operands = 0 : i64, tpu.core_type = #tpu.core_type<tc>, window_params = [{transform_indices = @transform_0, window_bounds = array<i64: 16, 128>}, {transform_indices = @transform_1, window_bounds = array<i64: 16, 128>}, {transform_indices = @transform_2, window_bounds = array<i64: 1, 8, 128>}]} {
    %c0_i32 = arith.constant 0 : i32
    %0 = arith.cmpi eq, %arg1, %c0_i32 : i32
    %1 = arith.extui %0 : i1 to i32
    %c0_i32_0 = arith.constant 0 : i32
    %2 = arith.cmpi ne, %1, %c0_i32_0 : i32
    scf.if %2 {
      %cst_10 = arith.constant 0.000000e+00 : f32
      %13 = vector.broadcast %cst_10 : f32 to vector<1x8x128xf32>
      %c0_11 = arith.constant 0 : index
      %c0_12 = arith.constant 0 : index
      %c0_13 = arith.constant 0 : index
      %14 = vector.load %arg4[%c0_11, %c0_12, %c0_13] : memref<1x8x128xf32, #tpu.memory_space<vmem>>, vector<1x8x128xf32>
      tpu.vector_store %arg4[%c0_11, %c0_12, %c0_13], %13 {strides = array<i32>} : memref<1x8x128xf32, #tpu.memory_space<vmem>>, vector<1x8x128xf32>,
    } else {
    }
    %c0 = arith.constant 0 : index
    %c0_1 = arith.constant 0 : index
    %3 = vector.load %arg2[%c0, %c0_1] : memref<16x128xf32, #tpu.memory_space<vmem>>, vector<16x128xf32>
    %c0_2 = arith.constant 0 : index
    %c0_3 = arith.constant 0 : index
    %4 = vector.load %arg3[%c0_2, %c0_3] : memref<16x128xf32, #tpu.memory_space<vmem>>, vector<16x128xf32>
    %5 = arith.subf %3, %4 : vector<16x128xf32>
    %6 = arith.mulf %5, %5 : vector<16x128xf32>
    %7 = vector.shape_cast %6 : vector<16x128xf32> to vector<2x8x128xf32>
    %cst = arith.constant dense<0.000000e+00> : vector<8x128xf32>
    %8 = vector.multi_reduction <add>, %7, %cst [0] : vector<2x8x128xf32> to vector<8x128xf32>
    %c0_4 = arith.constant 0 : index
    %c0_5 = arith.constant 0 : index
    %c0_6 = arith.constant 0 : index
    %9 = vector.load %arg4[%c0_4, %c0_5, %c0_6] : memref<1x8x128xf32, #tpu.memory_space<vmem>>, vector<1x8x128xf32>
    %10 = vector.shape_cast %8 : vector<8x128xf32> to vector<1x8x128xf32>
    %11 = arith.addf %9, %10 : vector<1x8x128xf32>
    %c0_7 = arith.constant 0 : index
    %c0_8 = arith.constant 0 : index
    %c0_9 = arith.constant 0 : index
    %12 = vector.load %arg4[%c0_7, %c0_8, %c0_9] : memref<1x8x128xf32, #tpu.memory_space<vmem>>, vector<1x8x128xf32>
    tpu.vector_store %arg4[%c0_7, %c0_8, %c0_9], %11 {strides = array<i32>} : memref<1x8x128xf32, #tpu.memory_space<vmem>>, vector<1x8x128xf32>,
    return
  }
  func.func @transform_0(%arg0: i32, %arg1: i32) -> (i32, i32) {
    %c1_i32 = arith.constant 1 : i32
    %0 = arith.muli %arg0, %c1_i32 : i32
    %1 = arith.addi %0, %arg1 : i32
    %c0_i32 = arith.constant 0 : i32
    %2 = arith.minsi %1, %c0_i32 : i32
    %c0_i32_0 = arith.constant 0 : i32
    %c0_i32_1 = arith.constant 0 : i32
    return %2, %c0_i32_0 : i32, i32
  }
  func.func @transform_1(%arg0: i32, %arg1: i32) -> (i32, i32) {
    %c1_i32 = arith.constant 1 : i32
    %0 = arith.muli %arg0, %c1_i32 : i32
    %1 = arith.addi %0, %arg1 : i32
    %c0_i32 = arith.constant 0 : i32
    %2 = arith.minsi %1, %c0_i32 : i32
    %c0_i32_0 = arith.constant 0 : i32
    %c0_i32_1 = arith.constant 0 : i32
    return %2, %c0_i32_0 : i32, i32
  }
  func.func @transform_2(%arg0: i32, %arg1: i32) -> (i32, i32, i32) {
    %c0_i32 = arith.constant 0 : i32
    %c0_i32_0 = arith.constant 0 : i32
    %c0_i32_1 = arith.constant 0 : i32
    return %arg0, %c0_i32, %c0_i32_0 : i32, i32, i32
  }
}

</mosaic_0001>

<llo_original>
// kernel: tpu_custom_call.1
$region0: #{tpu_custom_call.1}
  #allocation0 [shape = 'u32[]', space=smem, size = 0x4, offset = 0x4, fixed_abs, tag = 'smem constant byte address 0x4 - core index']
  #allocation1 [shape = 'u32[144,128]{1,0:T(1,128)}', space=vmem, size = 0x12000, scoped, tag = 'internal scratch']
  %s0 = inlined_call_operand.hbm [shape: f32[16,128], index: 0, kind: input, shape index: {}]
  %s1 = inlined_call_operand.hbm [shape: f32[16,128], index: 1, kind: input, shape index: {}]
  %s2 = inlined_call_operand.hbm [shape: f32[1,8,128], index: 2, kind: output, shape index: {}]
  %s3 = sld [smem:[#allocation0]]
  $region30: #{tpu_custom_call.1} parent=0
    _
  %s5 = ssub.s32 1, %s3
  %s6 = scalar_select 0, %s5, %s3
  $region1: #{tpu_custom_call.1} parent=0
    #allocation2 [shape = 'u8[8192]{0}', space=vmem, size = 0x2000, scoped, tag = 'input window, operand 0, single buffered']
    #allocation3 [shape = 's32[1]{0}', space=sflag, size = 0x4, scoped, tag = 'scoped memory for tpu_custom_call.1']
    #allocation4 [shape = 's32[1]{0}', space=sflag, size = 0x4, scoped, tag = 'scoped memory for tpu_custom_call.1']
    #allocation5 [shape = 'u8[8192]{0}', space=vmem, size = 0x2000, scoped, tag = 'input window, operand 1, single buffered']
    #allocation6 [shape = 's32[1]{0}', space=sflag, size = 0x4, scoped, tag = 'scoped memory for tpu_custom_call.1']
    #allocation7 [shape = 'u8[4096]{0}', space=vmem, size = 0x1000, scoped, tag = 'output window, operand 0, single buffered']
    %7 = vsyncpa [#allocation3], 0
    %8 = vsyncpa [#allocation6], 0
    %9 = vsyncpa [#allocation4], 0
    // Predicated region
    $region2: #{tpu_custom_call.1} parent=1 // pred_check
      _
    $region3: #{tpu_custom_call.1} parent=1 // pred_check_branch
      %11 = sbr.rel (0) target = $region5
    $region4: #{tpu_custom_call.1} parent=1 // pred_region
      %s12 = sadd.s32 0, 0
      %p13 = scmp.lt.s32.totalorder %s12, 0
      %s14 = scalar_select %p13, %s12, 0
      %s15 = smul.u32 2, %s14
      %s17 = ssub.s32 256, 256
      %18 = vsyncadd [#allocation3], %s17
      %s19 = smul.addr %s15, 128
      %s20 = scalar_lea.hbm %s0, %s19
      %s21 = sshll.u32 [#allocation2], 4
      %s22 = int_to_ptr.vmem [resolvable:$true] %s21
      %27 = dma.hbm_to_vmem [thread:$0]  %s20, 256, %s22, [#allocation3], 128, 128, 8
    $region5: #{tpu_custom_call.1} parent=1 // pred_fallthru
      _
    // Predicated region
    $region6: #{tpu_custom_call.1} parent=1 // pred_check
      _
    $region7: #{tpu_custom_call.1} parent=1 // pred_check_branch
      %29 = sbr.rel (0) target = $region9
    $region8: #{tpu_custom_call.1} parent=1 // pred_region
      %s30 = sadd.s32 0, 0
      %p31 = scmp.lt.s32.totalorder %s30, 0
      %s32 = scalar_select %p31, %s30, 0
      %s33 = smul.u32 2, %s32
      %s35 = ssub.s32 256, 256
      %36 = vsyncadd [#allocation6], %s35
      %s37 = smul.addr %s33, 128
      %s38 = scalar_lea.hbm %s1, %s37
      %s39 = sshll.u32 [#allocation5], 4
      %s40 = int_to_ptr.vmem [resolvable:$true] %s39
      %45 = dma.hbm_to_vmem [thread:$0]  %s38, 256, %s40, [#allocation6], 128, 128, 8
    $region9: #{tpu_custom_call.1} parent=1 // pred_fallthru
      _
    // Predicated region
    $region10: #{tpu_custom_call.1} parent=1 // pred_check
      _
    $region11: #{tpu_custom_call.1} parent=1 // pred_check_branch
      %47 = sbr.rel (0) target = $region13
    $region12: #{tpu_custom_call.1} parent=1 // pred_region
      %48 = dma.done [#allocation3], 256
    $region13: #{tpu_custom_call.1} parent=1 // pred_fallthru
      _
    // Predicated region
    $region14: #{tpu_custom_call.1} parent=1 // pred_check
      _
    $region15: #{tpu_custom_call.1} parent=1 // pred_check_branch
      %50 = sbr.rel (0) target = $region17
    $region16: #{tpu_custom_call.1} parent=1 // pred_region
      %51 = dma.done [#allocation6], 256
    $region17: #{tpu_custom_call.1} parent=1 // pred_fallthru
      _
    %s52 = sadd.s32 0, 0
    %p53 = scmp.lt.s32.totalorder %s52, 0
    %s54 = scalar_select %p53, %s52, 0
    %s55 = smul.u32 2, %s54
    %s56 = sadd.s32 0, 0
    %p57 = scmp.lt.s32.totalorder %s56, 0
    %s58 = scalar_select %p57, %s56, 0
    %s59 = smul.u32 2, %s58
    %p60 = scmp.eq.s32.totalorder 0, 0
    // Predicated region
    $region18: #{tpu_custom_call.1} parent=1 // pred_check
      %p61 = pneg %p60
    $region19: #{tpu_custom_call.1} parent=1 // pred_check_branch
      %63 = sbr.rel (%p61) target = $region21
    $region20: #{tpu_custom_call.1} parent=1 // pred_region
      %64 = vst [vmem:[#allocation7] sm:$0xff] 0.0
    $region21: #{tpu_custom_call.1} parent=1 // pred_fallthru
      _
    %v65 = vld [vmem:[#allocation2] sm:$0xff]
    %v66 = vld [vmem:[#allocation2 + $0x8] sm:$0xff]
    %v67 = vld [vmem:[#allocation5] sm:$0xff]
    %v68 = vld [vmem:[#allocation5 + $0x8] sm:$0xff]
    %v69 = vsub.f32 %v65, %v67
    %v70 = vsub.f32 %v66, %v68
    %v71 = vmul.f32 %v69, %v69
    %v72 = vmul.f32 %v70, %v70
    %v73 = vadd.f32 %v71, %v72
    %v74 = vld [vmem:[#allocation7] sm:$0xff]
    %v75 = vadd.f32 %v74, %v73
    %76 = vst [vmem:[#allocation7] sm:$0xff] %v75
    // Predicated region
    $region22: #{tpu_custom_call.1} parent=1 // pred_check
      _
    $region23: #{tpu_custom_call.1} parent=1 // pred_check_branch
      %78 = sbr.rel (0) target = $region25
    $region24: #{tpu_custom_call.1} parent=1 // pred_region
      %s80 = ssub.s32 128, 128
      %81 = vsyncadd [#allocation4], %s80
      %s83 = sshll.u32 [#allocation7], 4
      %s84 = int_to_ptr.vmem [resolvable:$true] %s83
      %86 = dma.vmem_to_hbm [thread:$0]  %s84, 128, %s2, [#allocation4]
    $region25: #{tpu_custom_call.1} parent=1 // pred_fallthru
      _
    // Predicated region
    $region26: #{tpu_custom_call.1} parent=1 // pred_check
      _
    $region27: #{tpu_custom_call.1} parent=1 // pred_check_branch
      %88 = sbr.rel (0) target = $region29
    $region28: #{tpu_custom_call.1} parent=1 // pred_region
      %89 = dma.done [#allocation4], 128
    $region29: #{tpu_custom_call.1} parent=1 // pred_fallthru
      _
    %90 = vsyncpa [#allocation3], 1
    %91 = vsyncpa [#allocation6], 1
    %92 = vsyncpa [#allocation4], 1

</llo_original>
